<compile_context>
chip_gen: v6e
topology: v6e:2x2x1
jax: 0.10.0
libtpu: 0.0.40
codegen_flags: <defaults>
</compile_context>

<pallas_src>
import jax
import jax.numpy as jnp
from jax.experimental import pallas as pl
from jax.experimental.pallas import tpu as pltpu

LANES = 128


def hard_sigmoid_kernel(x_ref, o_ref):
    x = x_ref[...]
    # relu6(x + 3) / 6 == clamp(x + 3, 0, 6) * (1/6).  Python-float constants
    # keep bf16 inputs in bf16 (no promotion to f32).
    o_ref[...] = (jnp.clip(x + 3.0, 0.0, 6.0) * (1.0 / 6.0)).astype(o_ref.dtype)


def _tpu_tuning():
    """Returns (target block bytes, # TensorCores the grid is sharded over)."""
    try:
        kind = jax.devices()[0].device_kind.lower()
    except Exception:  # pragma: no cover - defensive
        kind = ""
    if "v7" in kind:   # 3.2 TB/s HBM, 32 MiB scoped / 64 MiB physical VMEM, 2 TCs
        return 6 * 1024 * 1024, 2
    if "v6" in kind:   # ~1.4 TB/s, 32 MiB scoped-VMEM default
        return 4 * 1024 * 1024, 1
    if "v5" in kind:   # ~0.82 TB/s, 16 MiB scoped-VMEM default -> keep blocks <=3 MiB
        return 3 * 1024 * 1024, 1
    return 2 * 1024 * 1024, 1  # unknown chip: conservative


def _round_up(v, m):
    return ((v + m - 1) // m) * m


def _hard_sigmoid_call(x2d, grid, block_shape, index_map):
    n = x2d.size
    itemsize = jnp.dtype(x2d.dtype).itemsize
    return pl.pallas_call(
        hard_sigmoid_kernel,
        out_shape=jax.ShapeDtypeStruct(x2d.shape, x2d.dtype),
        grid_spec=pltpu.PrefetchScalarGridSpec(
            num_scalar_prefetch=0,
            grid=grid,
            in_specs=[pl.BlockSpec(block_shape, index_map)],
            out_specs=pl.BlockSpec(block_shape, index_map),
        ),
        compiler_params=pltpu.CompilerParams(
            # Shards the grid across both TensorCores on v7x; harmless elsewhere.
            dimension_semantics=("parallel",),
        ),
        cost_estimate=pl.CostEstimate(
            flops=4 * n, transcendentals=0, bytes_accessed=2 * n * itemsize,
        ),
    )(x2d)


def hard_sigmoid_pallas(x):
    """Elementwise hard-sigmoid matching nn.ReLU6(x + 3) / 6 on any float tensor."""
    orig_shape = x.shape
    dtype = x.dtype
    assert jnp.issubdtype(dtype, jnp.floating), "hard_sigmoid expects a float dtype"
    n = x.size
    if n == 0:
        return x
    itemsize = jnp.dtype(dtype).itemsize
    sublane = max(8, 32 // itemsize)          # 8 for f32, 16 for bf16

    target_block_bytes, num_tcs = _tpu_tuning()
    # Only split across v7x's two TensorCores when the tensor is big enough
    # that DMA time dwarfs the ~0.35 us per-grid-step fixed cost.
    split_cores = num_tcs if n * itemsize > (512 * 1024) else 1

    x_flat = x.reshape(-1)                    # free for a contiguous array

    if n % LANES == 0:
        # Main path: lane-dense 2-D slab with the widest last dim (multiple of
        # 128) that divides n -> wide unmasked vector stores, small grid.
        lane_w = LANES
        for w in (8192, 4096, 2048, 1024, 512, 256):
            if n % w == 0:
                lane_w = w
                break
        rows = n // lane_w
        row_bytes = lane_w * itemsize
        max_block_rows = max(
            sublane, (target_block_bytes // row_bytes) // sublane * sublane)
        block_rows = min(rows, max_block_rows)
        if split_cores > 1:
            # v7x: grid step count a multiple of the TC count (and >= 2) so
            # neither core idles and the split is balanced.
            steps = _round_up(max(pl.cdiv(rows, block_rows), split_cores),
                              split_cores)
            block_rows = pl.cdiv(rows, steps)
        if block_rows < rows:
            # Keep the sublane dim a multiple of the native packing; a block
            # equal to the full row count is always legal as-is.
            block_rows = min(rows, _round_up(block_rows, sublane))

        out2d = _hard_sigmoid_call(
            x_flat.reshape(rows, lane_w),
            grid=(pl.cdiv(rows, block_rows),),
            block_shape=(block_rows, lane_w),
            index_map=lambda i: (i, 0))
        out_flat = out2d.reshape(-1)
    else:
        # Rare unaligned-size path: view as (1, n) (free reshape) and tile the
        # lane dimension; Pallas masks the final partial block itself, so there
        # is no jnp.pad / output slice and HBM traffic stays at 2*n bytes.
        # Each block uses only 1 of 8 sublanes (8x VMEM footprint), so cap the
        # block width accordingly.  NN activation shapes essentially never hit
        # this branch.
        max_block_w = max(
            LANES, (target_block_bytes // (8 * itemsize)) // LANES * LANES)
        block_w = n if n <= max_block_w else max_block_w
        out2d = _hard_sigmoid_call(
            x_flat.reshape(1, n),
            grid=(pl.cdiv(n, block_w),),
            block_shape=(1, block_w),
            index_map=lambda i: (0, i))
        out_flat = out2d.reshape(-1)

    return out_flat.reshape(orig_shape)


if __name__ == "__main__":
    key = jax.random.PRNGKey(0)

    # NCHW input, as the PyTorch module would see it.
    x = jax.random.normal(key, (2, 4, 16, 16), dtype=jnp.float32) * 4.0
    out = hard_sigmoid_pallas(x)
    jax.block_until_ready(out)
    ref = jnp.clip(x + 3.0, 0.0, 6.0) / 6.0
    assert out.shape == x.shape
    assert out.dtype == x.dtype
    assert jnp.max(jnp.abs(out - ref)) < 1e-6

    # Larger tensor (8 MiB): exercises the multi-block grid (and the even
    # grid-step split on v7x).
    x_big = jax.random.normal(jax.random.PRNGKey(3), (8, 32, 64, 64),
                              dtype=jnp.float32) * 4.0
    out_big = hard_sigmoid_pallas(x_big)
    jax.block_until_ready(out_big)
    ref_big = jnp.clip(x_big + 3.0, 0.0, 6.0) / 6.0
    assert out_big.shape == x_big.shape
    assert jnp.max(jnp.abs(out_big - ref_big)) < 1e-6

    # Odd element count: exercises the unaligned (masked, no-pad) path.
    x_odd = jax.random.normal(jax.random.PRNGKey(1), (3, 5, 7),
                              dtype=jnp.float32) * 4.0
    out_odd = hard_sigmoid_pallas(x_odd)
    jax.block_until_ready(out_odd)
    ref_odd = jnp.clip(x_odd + 3.0, 0.0, 6.0) / 6.0
    assert out_odd.shape == x_odd.shape
    assert jnp.max(jnp.abs(out_odd - ref_odd)) < 1e-6

    # bf16: exercises the dtype-aware sublane path.
    x_bf = (jax.random.normal(jax.random.PRNGKey(2), (2, 4, 16, 16)) * 4.0
            ).astype(jnp.bfloat16)
    out_bf = hard_sigmoid_pallas(x_bf)
    jax.block_until_ready(out_bf)
    ref_bf = jnp.clip(x_bf + 3.0, 0.0, 6.0) * (1.0 / 6.0)
    assert out_bf.dtype == jnp.bfloat16
    assert jnp.max(jnp.abs(out_bf.astype(jnp.float32)
                           - ref_bf.astype(jnp.float32))) < 1e-2

    print("KERNEL_OK")
</pallas_src>

<mosaic_0001>
module attributes {stable_mosaic.version = 11 : i64} {
  func.func @hard_sigmoid_kernel(%arg0: i32, %arg1: memref<1x2048xf32, #tpu.memory_space<vmem>>, %arg2: memref<1x2048xf32, #tpu.memory_space<vmem>>) attributes {dimension_semantics = [#tpu.dimension_semantics<parallel>], iteration_bounds = array<i64: 1>, scalar_prefetch = 0 : i64, scratch_operands = 0 : i64, tpu.core_type = #tpu.core_type<tc>, window_params = [{transform_indices = @transform_0, window_bounds = array<i64: 1, 2048>}, {transform_indices = @transform_1, window_bounds = array<i64: 1, 2048>}]} {
    %c0 = arith.constant 0 : index
    %c0_0 = arith.constant 0 : index
    %0 = vector.load %arg1[%c0, %c0_0] : memref<1x2048xf32, #tpu.memory_space<vmem>>, vector<1x2048xf32>
    %cst = arith.constant 3.000000e+00 : f32
    %1 = vector.broadcast %cst : f32 to vector<1x2048xf32>
    %2 = arith.addf %0, %1 : vector<1x2048xf32>
    %cst_1 = arith.constant 0.000000e+00 : f32
    %cst_2 = arith.constant 6.000000e+00 : f32
    %3 = vector.broadcast %cst_1 : f32 to vector<1x2048xf32>
    %4 = arith.maximumf %3, %2 : vector<1x2048xf32>
    %5 = vector.broadcast %cst_2 : f32 to vector<1x2048xf32>
    %6 = arith.minimumf %5, %4 : vector<1x2048xf32>
    %cst_3 = arith.constant 0.166666672 : f32
    %7 = vector.broadcast %cst_3 : f32 to vector<1x2048xf32>
    %8 = arith.mulf %6, %7 : vector<1x2048xf32>
    %c0_4 = arith.constant 0 : index
    %c0_5 = arith.constant 0 : index
    %9 = vector.load %arg2[%c0_4, %c0_5] : memref<1x2048xf32, #tpu.memory_space<vmem>>, vector<1x2048xf32>
    tpu.vector_store %arg2[%c0_4, %c0_5], %8 {strides = array<i32>} : memref<1x2048xf32, #tpu.memory_space<vmem>>, vector<1x2048xf32>,
    return
  }
  func.func @transform_0(%arg0: i32) -> (i32, i32) {
    %c0_i32 = arith.constant 0 : i32
    %c0_i32_0 = arith.constant 0 : i32
    return %arg0, %c0_i32 : i32, i32
  }
  func.func @transform_1(%arg0: i32) -> (i32, i32) {
    %c0_i32 = arith.constant 0 : i32
    %c0_i32_0 = arith.constant 0 : i32
    return %arg0, %c0_i32 : i32, i32
  }
}

</mosaic_0001>

<llo_original>
// kernel: tpu_custom_call.1
$region0: #{tpu_custom_call.1}
  #allocation0 [shape = 'u32[]', space=smem, size = 0x4, offset = 0x4, fixed_abs, tag = 'smem constant byte address 0x4 - core index']
  #allocation1 [shape = 'u32[144,128]{1,0:T(1,128)}', space=vmem, size = 0x12000, scoped, tag = 'internal scratch']
  %s0 = inlined_call_operand.hbm [shape: f32[1,2048], index: 0, kind: input, shape index: {}]
  %s1 = inlined_call_operand.hbm [shape: f32[1,2048], index: 1, kind: output, shape index: {}]
  %s2 = sld [smem:[#allocation0]]
  $region18: #{tpu_custom_call.1} parent=0
    _
  %s4 = ssub.s32 1, %s2
  %s5 = scalar_select 0, %s4, %s2
  $region1: #{tpu_custom_call.1} parent=0
    #allocation2 [shape = 'u8[8192]{0}', space=vmem, size = 0x2000, scoped, tag = 'input window, operand 0, single buffered']
    #allocation3 [shape = 's32[1]{0}', space=sflag, size = 0x4, scoped, tag = 'scoped memory for tpu_custom_call.1']
    #allocation4 [shape = 's32[1]{0}', space=sflag, size = 0x4, scoped, tag = 'scoped memory for tpu_custom_call.1']
    #allocation5 [shape = 'u8[8192]{0}', space=vmem, size = 0x2000, scoped, tag = 'output window, operand 0, single buffered']
    %6 = vsyncpa [#allocation3], 0
    %7 = vsyncpa [#allocation4], 0
    // Predicated region
    $region2: #{tpu_custom_call.1} parent=1 // pred_check
      _
    $region3: #{tpu_custom_call.1} parent=1 // pred_check_branch
      %9 = sbr.rel (0) target = $region5
    $region4: #{tpu_custom_call.1} parent=1 // pred_region
      %s11 = ssub.s32 256, 256
      %12 = vsyncadd [#allocation3], %s11
      %s14 = sshll.u32 [#allocation2], 4
      %s15 = int_to_ptr.vmem [resolvable:$true] %s14
      %17 = dma.hbm_to_vmem [thread:$0]  %s0, 256, %s15, [#allocation3]
    $region5: #{tpu_custom_call.1} parent=1 // pred_fallthru
      _
    // Predicated region
    $region6: #{tpu_custom_call.1} parent=1 // pred_check
      _
    $region7: #{tpu_custom_call.1} parent=1 // pred_check_branch
      %19 = sbr.rel (0) target = $region9
    $region8: #{tpu_custom_call.1} parent=1 // pred_region
      %20 = dma.done [#allocation3], 256
    $region9: #{tpu_custom_call.1} parent=1 // pred_fallthru
      _
    %v21 = vld [vmem:[#allocation2] sm:$0xff]
    %v22 = vld [vmem:[#allocation2 + $0x8] sm:$0xff]
    %v23 = vadd.f32 %v21, 3.0
    %v24 = vadd.f32 %v22, 3.0
    %v25 = vmax.f32 %v23, 0.0
    %v26 = vmax.f32 %v24, 0.0
    %v27 = vmin.f32 %v25, 6.0
    %v28 = vmin.f32 %v26, 6.0
    %v29 = vmul.f32 %v27, 0.16666667
    %v30 = vmul.f32 %v28, 0.16666667
    %31 = vst [vmem:[#allocation5] sm:$0xff] %v29
    %32 = vst [vmem:[#allocation5 + $0x8] sm:$0xff] %v30
    // Predicated region
    $region10: #{tpu_custom_call.1} parent=1 // pred_check
      _
    $region11: #{tpu_custom_call.1} parent=1 // pred_check_branch
      %34 = sbr.rel (0) target = $region13
    $region12: #{tpu_custom_call.1} parent=1 // pred_region
      %s36 = ssub.s32 256, 256
      %37 = vsyncadd [#allocation4], %s36
      %s39 = sshll.u32 [#allocation5], 4
      %s40 = int_to_ptr.vmem [resolvable:$true] %s39
      %42 = dma.vmem_to_hbm [thread:$0]  %s40, 256, %s1, [#allocation4]
    $region13: #{tpu_custom_call.1} parent=1 // pred_fallthru
      _
    // Predicated region
    $region14: #{tpu_custom_call.1} parent=1 // pred_check
      _
    $region15: #{tpu_custom_call.1} parent=1 // pred_check_branch
      %44 = sbr.rel (0) target = $region17
    $region16: #{tpu_custom_call.1} parent=1 // pred_region
      %45 = dma.done [#allocation4], 256
    $region17: #{tpu_custom_call.1} parent=1 // pred_fallthru
      _
    %46 = vsyncpa [#allocation3], 1
    %47 = vsyncpa [#allocation4], 1

</llo_original>
